<compile_context>
chip_gen: v5e
topology: v5e:2x2
jax: 0.10.0
libtpu: 0.0.40
codegen_flags: <defaults>
</compile_context>

<pallas_src>
import functools

import jax
import jax.numpy as jnp
from jax.experimental import pallas as pl
from jax.experimental.pallas import tpu as pltpu

BN_EPS = 1e-5


# ----------------------------- Pallas kernel ------------------------------- #
def _fused_mlp_kernel(num_hidden, x_ref, *refs):
    """Fused forward of the whole MLP for one batch tile (transposed layout).

    x_ref  : (C0, TILE_B)  activations, batch in the lane (last) axis
    refs   : [Wt0, b0, ..., Wt_{L-1}, b_{L-1}, w_head_col, b_head, o_ref]
      Wt_i       : (C_{i+1}, C_i)  eval-mode BatchNorm already folded in
      b_i        : (C_{i+1}, 1)    f32 folded bias (broadcast over lanes)
      w_head_col : (C_L, 1)        f32
      b_head     : (1, 1)          f32
      o_ref      : (1, TILE_B)     f32, lane-dense output row
    Dropout is identity in eval mode.
    """
    o_ref = refs[-1]
    h = x_ref[...]                                        # (C0, TILE_B)
    for i in range(num_hidden):                           # unrolled at trace
        wt = refs[2 * i][...]                             # (Cout, Cin)
        bt = refs[2 * i + 1][...]                         # (Cout, 1)
        y = jnp.dot(wt, h.astype(wt.dtype),
                    preferred_element_type=jnp.float32) + bt
        h = jnp.maximum(y, 0.0)                           # f32, lane-dense
    # Head Linear(C_L, 1): lane-dense VPU multiply + sublane (XLU) reduce
    # instead of a degenerate 1-column MXU matmul.
    w_col = refs[2 * num_hidden][...]                     # (C_L, 1)
    b_head = refs[2 * num_hidden + 1][...]                # (1, 1)
    o_ref[...] = jnp.sum(h * w_col, axis=0, keepdims=True) + b_head


# ------------------------------ JAX wrappers -------------------------------- #
def fold_batchnorm_transposed(params):
    """Fold eval-mode BatchNorm1d into the preceding Linear and transpose for
    the (C, TILE_B) in-kernel layout. Done once, in JAX, outside the kernel."""
    folded = []
    for (w, b, gamma, beta, mean, var) in params["hidden"]:
        scale = gamma * jax.lax.rsqrt(var + BN_EPS)       # (1, Cout)
        w_t = (w * scale).T                               # (Cout, Cin)
        b_t = ((b - mean) * scale + beta).T               # (Cout, 1)
        folded.append((w_t, b_t))
    w_fin, b_fin = params["final"]                        # (C_L, 1), (1, 1)
    return folded, w_fin, b_fin


def _pick_tile(batch, max_tile):
    """Largest multiple of 128 that divides batch (capped at max_tile); if none
    exists, fall back to one full-batch block (valid: block == full dim)."""
    best = None
    t = 128
    while t <= min(batch, max_tile):
        if batch % t == 0:
            best = t
        t += 128
    return best if best is not None else batch


def neural_network_forward(x, params, *, tile_b=512,
                           compute_dtype=jnp.float32):
    """x: (batch, input_size) f32.  Returns (batch, 1) f32.

    compute_dtype=jnp.bfloat16 enables the bf16 streaming path (recommended on
    v6e/v7x; keep the f32 default on v5e)."""
    folded_t, w_col, b_head = fold_batchnorm_transposed(params)
    batch, in_f = x.shape
    num_hidden = len(folded_t)

    tile_b = _pick_tile(batch, tile_b)
    grid = (batch // tile_b,)

    # Transposed, lane-dense activation layout: (in_f, batch). Layout plumbing
    # done once in XLA; x itself is small (batch x in_f).
    x_t = x.T.astype(compute_dtype)

    flat_args = [x_t]
    in_specs = [pl.BlockSpec((in_f, tile_b), lambda i: (0, i))]
    for (w_t, b_t) in folded_t:
        flat_args += [w_t.astype(compute_dtype), b_t]     # bias stays f32
        in_specs += [pl.BlockSpec(w_t.shape, lambda i: (0, 0)),
                     pl.BlockSpec(b_t.shape, lambda i: (0, 0))]
    flat_args += [w_col, b_head]                          # head stays f32
    in_specs += [pl.BlockSpec(w_col.shape, lambda i: (0, 0)),
                 pl.BlockSpec(b_head.shape, lambda i: (0, 0))]

    # Advisory cost estimate.
    itemsize = jnp.dtype(compute_dtype).itemsize
    flops = 0
    bytes_accessed = x_t.size * itemsize + batch * 4      # x stream + output
    c_in = in_f
    for (w_t, b_t) in folded_t:
        c_out = w_t.shape[0]
        flops += 2 * batch * c_in * c_out
        bytes_accessed += w_t.size * itemsize + b_t.size * 4
        c_in = c_out
    flops += 2 * batch * c_in
    bytes_accessed += (w_col.size + b_head.size) * 4

    out = pl.pallas_call(
        functools.partial(_fused_mlp_kernel, num_hidden),
        out_shape=jax.ShapeDtypeStruct((1, batch), jnp.float32),
        grid=grid,
        in_specs=in_specs,
        out_specs=pl.BlockSpec((1, tile_b), lambda i: (0, i)),
        compiler_params=pltpu.CompilerParams(
            dimension_semantics=("parallel",)),
        cost_estimate=pl.CostEstimate(
            flops=flops, transcendentals=0, bytes_accessed=bytes_accessed),
    )(*flat_args)
    # (1, batch) row-major == (batch, 1): reshape is free.
    return out.reshape(batch, 1)


# --------------------------- Parameter construction ------------------------- #
def init_params(key, input_size, width, num_layers):
    """Deterministic synthetic parameters mirroring the PyTorch module shapes."""
    params = {"hidden": [], "final": None}
    in_f = input_size
    cur_w = width
    for layer_idx in range(num_layers):
        out_f = cur_w if layer_idx == 0 else max(cur_w // 2, 1)
        if layer_idx > 0:
            cur_w = out_f
        key, kw, kb, kg, kbt, km, kv = jax.random.split(key, 7)
        scale = 1.0 / jnp.sqrt(jnp.float32(in_f))
        w = jax.random.uniform(kw, (in_f, out_f), jnp.float32, -scale, scale)
        b = jax.random.uniform(kb, (1, out_f), jnp.float32, -scale, scale)
        gamma = 1.0 + 0.1 * jax.random.normal(kg, (1, out_f), jnp.float32)
        beta = 0.1 * jax.random.normal(kbt, (1, out_f), jnp.float32)
        mean = 0.1 * jax.random.normal(km, (1, out_f), jnp.float32)
        var = 1.0 + 0.1 * jax.random.uniform(kv, (1, out_f), jnp.float32)
        params["hidden"].append((w, b, gamma, beta, mean, var))
        in_f = out_f
    key, kw, kb = jax.random.split(key, 3)
    scale = 1.0 / jnp.sqrt(jnp.float32(in_f))
    w = jax.random.uniform(kw, (in_f, 1), jnp.float32, -scale, scale)
    b = jax.random.uniform(kb, (1, 1), jnp.float32, -scale, scale)
    params["final"] = (w, b)
    return params


# Pure-JAX reference (unfused, raw BN math) for sanity checking the kernel path.
def reference_forward(x, params):
    h = x
    for (w, b, gamma, beta, mean, var) in params["hidden"]:
        y = h @ w + b
        y = (y - mean) / jnp.sqrt(var + BN_EPS) * gamma + beta
        h = jnp.maximum(y, 0.0)
    w, b = params["final"]
    return h @ w + b


if __name__ == "__main__":
    INPUT_SIZE = 16
    WIDTH = 32
    NUM_LAYERS = 3
    BATCH = 1024
    TILE_B = 512   # grid=(2,), batch axis "parallel" -> both TCs busy on v7x

    key = jax.random.PRNGKey(0)
    key, kx, kp = jax.random.split(key, 3)
    x = jax.random.normal(kx, (BATCH, INPUT_SIZE), jnp.float32)
    params = init_params(kp, INPUT_SIZE, WIDTH, NUM_LAYERS)

    ref = reference_forward(x, params)

    # f32 path (default; recommended on v5e).
    forward_f32 = jax.jit(functools.partial(neural_network_forward,
                                            tile_b=TILE_B))
    out_f32 = jax.block_until_ready(forward_f32(x, params))
    assert out_f32.shape == (BATCH, 1), out_f32.shape
    assert jnp.allclose(out_f32, ref, atol=1e-4, rtol=1e-4)

    # bf16 streaming path (recommended on v6e/v7x): halves the dominant HBM
    # stream; matmuls still accumulate in f32.
    forward_bf16 = jax.jit(functools.partial(neural_network_forward,
                                             tile_b=TILE_B,
                                             compute_dtype=jnp.bfloat16))
    out_bf16 = jax.block_until_ready(forward_bf16(x, params))
    assert out_bf16.shape == (BATCH, 1), out_bf16.shape
    assert jnp.allclose(out_bf16, ref, atol=1e-1, rtol=1e-1)

    print("KERNEL_OK")
</pallas_src>

<mosaic_0001>
module attributes {stable_mosaic.version = 11 : i64} {
  func.func @_fused_mlp_kernel(%arg0: i32, %arg1: memref<16x512xf32, #tpu.memory_space<vmem>>, %arg2: memref<32x16xf32, #tpu.memory_space<vmem>>, %arg3: memref<32x1xf32, #tpu.memory_space<vmem>>, %arg4: memref<16x32xf32, #tpu.memory_space<vmem>>, %arg5: memref<16x1xf32, #tpu.memory_space<vmem>>, %arg6: memref<8x16xf32, #tpu.memory_space<vmem>>, %arg7: memref<8x1xf32, #tpu.memory_space<vmem>>, %arg8: memref<8x1xf32, #tpu.memory_space<vmem>>, %arg9: memref<1x1xf32, #tpu.memory_space<vmem>>, %arg10: memref<1x512xf32, #tpu.memory_space<vmem>>) attributes {dimension_semantics = [#tpu.dimension_semantics<parallel>], iteration_bounds = array<i64: 2>, scalar_prefetch = 0 : i64, scratch_operands = 0 : i64, tpu.core_type = #tpu.core_type<tc>, window_params = [{transform_indices = @transform_0, window_bounds = array<i64: 16, 512>}, {pipeline_mode = #tpu.pipeline_mode<synchronous>, transform_indices = @transform_1, window_bounds = array<i64: 32, 16>}, {pipeline_mode = #tpu.pipeline_mode<synchronous>, transform_indices = @transform_2, window_bounds = array<i64: 32, 1>}, {pipeline_mode = #tpu.pipeline_mode<synchronous>, transform_indices = @transform_3, window_bounds = array<i64: 16, 32>}, {pipeline_mode = #tpu.pipeline_mode<synchronous>, transform_indices = @transform_4, window_bounds = array<i64: 16, 1>}, {pipeline_mode = #tpu.pipeline_mode<synchronous>, transform_indices = @transform_5, window_bounds = array<i64: 8, 16>}, {pipeline_mode = #tpu.pipeline_mode<synchronous>, transform_indices = @transform_6, window_bounds = array<i64: 8, 1>}, {pipeline_mode = #tpu.pipeline_mode<synchronous>, transform_indices = @transform_7, window_bounds = array<i64: 8, 1>}, {pipeline_mode = #tpu.pipeline_mode<synchronous>, transform_indices = @transform_8, window_bounds = array<i64: 1, 1>}, {transform_indices = @transform_9, window_bounds = array<i64: 1, 512>}]} {
    %c0 = arith.constant 0 : index
    %c0_0 = arith.constant 0 : index
    %0 = vector.load %arg1[%c0, %c0_0] : memref<16x512xf32, #tpu.memory_space<vmem>>, vector<16x512xf32>
    %c0_1 = arith.constant 0 : index
    %c0_2 = arith.constant 0 : index
    %1 = vector.load %arg2[%c0_1, %c0_2] : memref<32x16xf32, #tpu.memory_space<vmem>>, vector<32x16xf32>
    %c0_3 = arith.constant 0 : index
    %c0_4 = arith.constant 0 : index
    %2 = vector.load %arg3[%c0_3, %c0_4] : memref<32x1xf32, #tpu.memory_space<vmem>>, vector<32x1xf32>
    %cst = arith.constant dense<0.000000e+00> : vector<32x512xf32>
    %3 = tpu.matmul %1, %0, %cst {dimension_numbers = #tpu.dot_dimension_numbers<[1], [0], [0], [1], [0, 0, 1, 1], [], []>} : vector<32x16xf32>, vector<16x512xf32>, vector<32x512xf32> -> vector<32x512xf32>
    %4 = vector.broadcast %2 : vector<32x1xf32> to vector<32x512xf32>
    %5 = arith.addf %3, %4 : vector<32x512xf32>
    %cst_5 = arith.constant 0.000000e+00 : f32
    %6 = vector.broadcast %cst_5 : f32 to vector<32x512xf32>
    %7 = arith.maximumf %5, %6 : vector<32x512xf32>
    %c0_6 = arith.constant 0 : index
    %c0_7 = arith.constant 0 : index
    %8 = vector.load %arg4[%c0_6, %c0_7] : memref<16x32xf32, #tpu.memory_space<vmem>>, vector<16x32xf32>
    %c0_8 = arith.constant 0 : index
    %c0_9 = arith.constant 0 : index
    %9 = vector.load %arg5[%c0_8, %c0_9] : memref<16x1xf32, #tpu.memory_space<vmem>>, vector<16x1xf32>
    %cst_10 = arith.constant dense<0.000000e+00> : vector<16x512xf32>
    %10 = tpu.matmul %8, %7, %cst_10 {dimension_numbers = #tpu.dot_dimension_numbers<[1], [0], [0], [1], [0, 0, 1, 1], [], []>} : vector<16x32xf32>, vector<32x512xf32>, vector<16x512xf32> -> vector<16x512xf32>
    %11 = vector.broadcast %9 : vector<16x1xf32> to vector<16x512xf32>
    %12 = arith.addf %10, %11 : vector<16x512xf32>
    %cst_11 = arith.constant 0.000000e+00 : f32
    %13 = vector.broadcast %cst_11 : f32 to vector<16x512xf32>
    %14 = arith.maximumf %12, %13 : vector<16x512xf32>
    %c0_12 = arith.constant 0 : index
    %c0_13 = arith.constant 0 : index
    %15 = vector.load %arg6[%c0_12, %c0_13] : memref<8x16xf32, #tpu.memory_space<vmem>>, vector<8x16xf32>
    %c0_14 = arith.constant 0 : index
    %c0_15 = arith.constant 0 : index
    %16 = vector.load %arg7[%c0_14, %c0_15] : memref<8x1xf32, #tpu.memory_space<vmem>>, vector<8x1xf32>
    %cst_16 = arith.constant dense<0.000000e+00> : vector<8x512xf32>
    %17 = tpu.matmul %15, %14, %cst_16 {dimension_numbers = #tpu.dot_dimension_numbers<[1], [0], [0], [1], [0, 0, 1, 1], [], []>} : vector<8x16xf32>, vector<16x512xf32>, vector<8x512xf32> -> vector<8x512xf32>
    %18 = vector.broadcast %16 : vector<8x1xf32> to vector<8x512xf32>
    %19 = arith.addf %17, %18 : vector<8x512xf32>
    %cst_17 = arith.constant 0.000000e+00 : f32
    %20 = vector.broadcast %cst_17 : f32 to vector<8x512xf32>
    %21 = arith.maximumf %19, %20 : vector<8x512xf32>
    %c0_18 = arith.constant 0 : index
    %c0_19 = arith.constant 0 : index
    %22 = vector.load %arg8[%c0_18, %c0_19] : memref<8x1xf32, #tpu.memory_space<vmem>>, vector<8x1xf32>
    %c0_20 = arith.constant 0 : index
    %c0_21 = arith.constant 0 : index
    %23 = vector.load %arg9[%c0_20, %c0_21] : memref<1x1xf32, #tpu.memory_space<vmem>>, vector<1x1xf32>
    %24 = vector.broadcast %22 : vector<8x1xf32> to vector<8x512xf32>
    %25 = arith.mulf %21, %24 : vector<8x512xf32>
    %cst_22 = arith.constant dense<0.000000e+00> : vector<512xf32>
    %26 = vector.multi_reduction <add>, %25, %cst_22 [0] : vector<8x512xf32> to vector<512xf32>
    %27 = vector.shape_cast %26 : vector<512xf32> to vector<1x512xf32>
    %28 = vector.broadcast %23 : vector<1x1xf32> to vector<1x512xf32>
    %29 = arith.addf %27, %28 : vector<1x512xf32>
    %c0_23 = arith.constant 0 : index
    %c0_24 = arith.constant 0 : index
    %30 = vector.load %arg10[%c0_23, %c0_24] : memref<1x512xf32, #tpu.memory_space<vmem>>, vector<1x512xf32>
    tpu.vector_store %arg10[%c0_23, %c0_24], %29 {strides = array<i32>} : memref<1x512xf32, #tpu.memory_space<vmem>>, vector<1x512xf32>,
    return
  }
  func.func @transform_0(%arg0: i32) -> (i32, i32) {
    %c0_i32 = arith.constant 0 : i32
    %c0_i32_0 = arith.constant 0 : i32
    return %c0_i32, %arg0 : i32, i32
  }
  func.func @transform_1(%arg0: i32) -> (i32, i32) {
    %c0_i32 = arith.constant 0 : i32
    %c0_i32_0 = arith.constant 0 : i32
    %c0_i32_1 = arith.constant 0 : i32
    return %c0_i32, %c0_i32_0 : i32, i32
  }
  func.func @transform_2(%arg0: i32) -> (i32, i32) {
    %c0_i32 = arith.constant 0 : i32
    %c0_i32_0 = arith.constant 0 : i32
    %c0_i32_1 = arith.constant 0 : i32
    return %c0_i32, %c0_i32_0 : i32, i32
  }
  func.func @transform_3(%arg0: i32) -> (i32, i32) {
    %c0_i32 = arith.constant 0 : i32
    %c0_i32_0 = arith.constant 0 : i32
    %c0_i32_1 = arith.constant 0 : i32
    return %c0_i32, %c0_i32_0 : i32, i32
  }
  func.func @transform_4(%arg0: i32) -> (i32, i32) {
    %c0_i32 = arith.constant 0 : i32
    %c0_i32_0 = arith.constant 0 : i32
    %c0_i32_1 = arith.constant 0 : i32
    return %c0_i32, %c0_i32_0 : i32, i32
  }
  func.func @transform_5(%arg0: i32) -> (i32, i32) {
    %c0_i32 = arith.constant 0 : i32
    %c0_i32_0 = arith.constant 0 : i32
    %c0_i32_1 = arith.constant 0 : i32
    return %c0_i32, %c0_i32_0 : i32, i32
  }
  func.func @transform_6(%arg0: i32) -> (i32, i32) {
    %c0_i32 = arith.constant 0 : i32
    %c0_i32_0 = arith.constant 0 : i32
    %c0_i32_1 = arith.constant 0 : i32
    return %c0_i32, %c0_i32_0 : i32, i32
  }
  func.func @transform_7(%arg0: i32) -> (i32, i32) {
    %c0_i32 = arith.constant 0 : i32
    %c0_i32_0 = arith.constant 0 : i32
    %c0_i32_1 = arith.constant 0 : i32
    return %c0_i32, %c0_i32_0 : i32, i32
  }
  func.func @transform_8(%arg0: i32) -> (i32, i32) {
    %c0_i32 = arith.constant 0 : i32
    %c0_i32_0 = arith.constant 0 : i32
    %c0_i32_1 = arith.constant 0 : i32
    return %c0_i32, %c0_i32_0 : i32, i32
  }
  func.func @transform_9(%arg0: i32) -> (i32, i32) {
    %c0_i32 = arith.constant 0 : i32
    %c0_i32_0 = arith.constant 0 : i32
    return %c0_i32, %arg0 : i32, i32
  }
}

</mosaic_0001>

<llo_original>
// kernel: neural_network_forward.1
$region0: #{neural_network_forward.1}
  #allocation0 [shape = 'u32[]', space=smem, size = 0x4, offset = 0x4, fixed_abs, tag = 'smem constant byte address 0x4 - core index']
  #allocation1 [shape = 'u32[72,128]{1,0:T(1,128)}', space=vmem, size = 0x9000, scoped, tag = 'internal scratch']
  #allocation2 [shape = 'f32[1,1]{1,0:T(1,128)S(1)}', space=vmem, size = 0x200, scoped, tag = 'scoped memory for neural_network_forward.1']
  %s0 = inlined_call_operand.vmem [shape: f32[16,1024], index: 0, kind: input, shape index: {}]
  %s1 = inlined_call_operand.vmem [shape: f32[32,16], index: 1, kind: input, shape index: {}]
  %s2 = inlined_call_operand.vmem [shape: f32[32,1], index: 2, kind: input, shape index: {}]
  %s3 = inlined_call_operand.vmem [shape: f32[16,32], index: 3, kind: input, shape index: {}]
  %s4 = inlined_call_operand.vmem [shape: f32[16,1], index: 4, kind: input, shape index: {}]
  %s5 = inlined_call_operand.vmem [shape: f32[8,16], index: 5, kind: input, shape index: {}]
  %s6 = inlined_call_operand.vmem [shape: f32[8,1], index: 6, kind: input, shape index: {}]
  %s7 = inlined_call_operand.vmem [shape: f32[8,1], index: 7, kind: input, shape index: {}]
  %s8 = inlined_call_operand.<no memory space> [shape: f32[1,1], index: 8, kind: input, shape index: {}]
  %s9 = inlined_call_operand.hbm [shape: f32[1,1024], index: 9, kind: output, shape index: {}]
  %s10 = sld [smem:[#allocation0]]
  $region92: #{neural_network_forward.1} parent=0
    _
  %s12 = ssub.s32 1, %s10
  %s13 = scalar_select 0, %s12, %s10
  %v14 = vstv %s8
  %15 = vst [vmem:[#allocation2] sm:$0x1] %v14
  $region1: #{neural_network_forward.1} parent=0
    #allocation3 [shape = 'u8[65536]{0}', space=vmem, size = 0x10000, scoped, tag = 'input window, operand 0']
    #allocation4 [shape = 'u8[4096]{0}', space=vmem, size = 0x1000, scoped, tag = 'output window, operand 0']
    #allocation5 [shape = 's32[2]{0}', space=sflag, size = 0x8, scoped, tag = 'scoped memory for neural_network_forward.1']
    %16 = vsyncpa [#allocation5], 0
    %s17 = scalar_lea.sflag [#allocation5], 1
    %18 = vsyncpa %s17, 0
    loop: start=0, step=1, limit=4
    $region2: #{neural_network_forward.1} parent=1 // loop_pre_header
      _
    $region3: #{neural_network_forward.1} parent=1 // loop_header
      %s20 = sphi 0, %s24
      %p21 = scmp.ge.s32.totalorder %s20, 4
      %s30 = sphi 0, %s32
      %s33 = sphi 0, %s30
      %s34 = sphi 0, %s33
      %s50 = sphi 0, %s34
      %s54 = sphi 0, %s54
      %s56 = sphi 0, %s54
      %s57 = sphi 0, %s56
      %s71 = sphi 0, %s57
      %s75 = sphi 0, %s75
      %s77 = sphi 0, %s75
      %s78 = sphi 0, %s77
      %s92 = sphi 0, %s78
      %s96 = sphi 0, %s96
      %s98 = sphi 0, %s96
      %s99 = sphi 0, %s98
      %s113 = sphi 0, %s99
      %s117 = sphi 0, %s117
      %s119 = sphi 0, %s117
      %s120 = sphi 0, %s119
      %s134 = sphi 0, %s120
      %s138 = sphi 0, %s138
      %s140 = sphi 0, %s138
      %s141 = sphi 0, %s140
      %s155 = sphi 0, %s141
      %s159 = sphi 0, %s159
      %s161 = sphi 0, %s159
      %s162 = sphi 0, %s161
      %s176 = sphi 0, %s162
      %s180 = sphi 0, %s180
      %s182 = sphi 0, %s180
      %s183 = sphi 0, %s182
      %s197 = sphi 0, %s183
      %s201 = sphi 0, %s201
      %s203 = sphi 0, %s201
      %s204 = sphi 0, %s203
      %s218 = sphi 0, %s204
      %s224 = sphi 0, %s226
      %s227 = sphi 0, %s224
      %s228 = sphi 0, %s227
      %s244 = sphi 0, %s228
    $region4: #{neural_network_forward.1} parent=1 // loop_header_branch
      %23 = sbr.rel (%p21) target = $region8
    $region5: #{neural_network_forward.1} parent=1 // loop_body
      %s25 = ssub.s32 %s20, 1
      %s26 = ssub.s32 %s20, 2
      %s27 = sadd.s32 %s20, 1
      %s28 = ssub.s32 %s20, %s27
      %p29 = scmp.eq.s32.totalorder %s28, 0
      %s31 = sadd.s32 %s30, 1
      %s32 = scalar_select %p29, %s30, %s31
      %p35 = pneg %p29
      %p36 = scmp.eq.s32.totalorder %s20, 1
      %p37 = por %p35, %p36
      %p38 = scmp.ne.s32.totalorder %s30, %s33
      %p39 = scmp.eq.s32.totalorder %s20, 0
      %p40 = por %p38, %p39
      %p41 = scmp.ne.s32.totalorder %s30, %s33
      %p42 = scmp.eq.s32.totalorder %s25, 1
      %p43 = por %p41, %p42
      %p44 = scmp.ne.s32.totalorder %s33, %s34
      %p45 = scmp.eq.s32.totalorder %s25, 0
      %p46 = por %p44, %p45
      %p47 = scmp.ne.s32.totalorder %s33, %s34
      %p48 = scmp.eq.s32.totalorder %s26, 1
      %p49 = por %p47, %p48
      %p51 = scmp.ne.s32.totalorder %s34, %s50
      %p52 = scmp.eq.s32.totalorder %s26, 0
      %p53 = por %p51, %p52
      %s55 = sadd.s32 %s54, 1
      %p58 = scmp.eq.s32.totalorder %s20, 1
      %p59 = scmp.ne.s32.totalorder %s54, %s56
      %p60 = scmp.eq.s32.totalorder %s20, 0
      %p61 = por %p59, %p60
      %p62 = scmp.ne.s32.totalorder %s54, %s56
      %p63 = scmp.eq.s32.totalorder %s25, 1
      %p64 = por %p62, %p63
      %p65 = scmp.ne.s32.totalorder %s56, %s57
      %p66 = scmp.eq.s32.totalorder %s25, 0
      %p67 = por %p65, %p66
      %p68 = scmp.ne.s32.totalorder %s56, %s57
      %p69 = scmp.eq.s32.totalorder %s26, 1
      %p70 = por %p68, %p69
      %p72 = scmp.ne.s32.totalorder %s57, %s71
      %p73 = scmp.eq.s32.totalorder %s26, 0
      %p74 = por %p72, %p73
      %s76 = sadd.s32 %s75, 1
      %p79 = scmp.eq.s32.totalorder %s20, 1
      %p80 = scmp.ne.s32.totalorder %s75, %s77
      %p81 = scmp.eq.s32.totalorder %s20, 0
      %p82 = por %p80, %p81
      %p83 = scmp.ne.s32.totalorder %s75, %s77
      %p84 = scmp.eq.s32.totalorder %s25, 1
      %p85 = por %p83, %p84
      %p86 = scmp.ne.s32.totalorder %s77, %s78
      %p87 = scmp.eq.s32.totalorder %s25, 0
      %p88 = por %p86, %p87
      %p89 = scmp.ne.s32.totalorder %s77, %s78
      %p90 = scmp.eq.s32.totalorder %s26, 1
      %p91 = por %p89, %p90
      %p93 = scmp.ne.s32.totalorder %s78, %s92
      %p94 = scmp.eq.s32.totalorder %s26, 0
      %p95 = por %p93, %p94
      %s97 = sadd.s32 %s96, 1
      %p100 = scmp.eq.s32.totalorder %s20, 1
      %p101 = scmp.ne.s32.totalorder %s96, %s98
      %p102 = scmp.eq.s32.totalorder %s20, 0
      %p103 = por %p101, %p102
      %p104 = scmp.ne.s32.totalorder %s96, %s98
      %p105 = scmp.eq.s32.totalorder %s25, 1
      %p106 = por %p104, %p105
      %p107 = scmp.ne.s32.totalorder %s98, %s99
      %p108 = scmp.eq.s32.totalorder %s25, 0
      %p109 = por %p107, %p108
      %p110 = scmp.ne.s32.totalorder %s98, %s99
      %p111 = scmp.eq.s32.totalorder %s26, 1
      %p112 = por %p110, %p111
      %p114 = scmp.ne.s32.totalorder %s99, %s113
      %p115 = scmp.eq.s32.totalorder %s26, 0
      %p116 = por %p114, %p115
      %s118 = sadd.s32 %s117, 1
      %p121 = scmp.eq.s32.totalorder %s20, 1
      %p122 = scmp.ne.s32.totalorder %s117, %s119
      %p123 = scmp.eq.s32.totalorder %s20, 0
      %p124 = por %p122, %p123
      %p125 = scmp.ne.s32.totalorder %s117, %s119
      %p126 = scmp.eq.s32.totalorder %s25, 1
      %p127 = por %p125, %p126
      %p128 = scmp.ne.s32.totalorder %s119, %s120
      %p129 = scmp.eq.s32.totalorder %s25, 0
      %p130 = por %p128, %p129
      %p131 = scmp.ne.s32.totalorder %s119, %s120
      %p132 = scmp.eq.s32.totalorder %s26, 1
      %p133 = por %p131, %p132
      %p135 = scmp.ne.s32.totalorder %s120, %s134
      %p136 = scmp.eq.s32.totalorder %s26, 0
      %p137 = por %p135, %p136
      %s139 = sadd.s32 %s138, 1
      %p142 = scmp.eq.s32.totalorder %s20, 1
      %p143 = scmp.ne.s32.totalorder %s138, %s140
      %p144 = scmp.eq.s32.totalorder %s20, 0
      %p145 = por %p143, %p144
      %p146 = scmp.ne.s32.totalorder %s138, %s140
      %p147 = scmp.eq.s32.totalorder %s25, 1
      %p148 = por %p146, %p147
      %p149 = scmp.ne.s32.totalorder %s140, %s141
      %p150 = scmp.eq.s32.totalorder %s25, 0
      %p151 = por %p149, %p150
      %p152 = scmp.ne.s32.totalorder %s140, %s141
      %p153 = scmp.eq.s32.totalorder %s26, 1
      %p154 = por %p152, %p153
      %p156 = scmp.ne.s32.totalorder %s141, %s155
      %p157 = scmp.eq.s32.totalorder %s26, 0
      %p158 = por %p156, %p157
      %s160 = sadd.s32 %s159, 1
      %p163 = scmp.eq.s32.totalorder %s20, 1
      %p164 = scmp.ne.s32.totalorder %s159, %s161
      %p165 = scmp.eq.s32.totalorder %s20, 0
      %p166 = por %p164, %p165
      %p167 = scmp.ne.s32.totalorder %s159, %s161
      %p168 = scmp.eq.s32.totalorder %s25, 1
      %p169 = por %p167, %p168
      %p170 = scmp.ne.s32.totalorder %s161, %s162
      %p171 = scmp.eq.s32.totalorder %s25, 0
      %p172 = por %p170, %p171
      %p173 = scmp.ne.s32.totalorder %s161, %s162
      %p174 = scmp.eq.s32.totalorder %s26, 1
      %p175 = por %p173, %p174
      %p177 = scmp.ne.s32.totalorder %s162, %s176
      %p178 = scmp.eq.s32.totalorder %s26, 0
      %p179 = por %p177, %p178
      %s181 = sadd.s32 %s180, 1
      %p184 = scmp.eq.s32.totalorder %s20, 1
      %p185 = scmp.ne.s32.totalorder %s180, %s182
      %p186 = scmp.eq.s32.totalorder %s20, 0
      %p187 = por %p185, %p186
      %p188 = scmp.ne.s32.totalorder %s180, %s182
      %p189 = scmp.eq.s32.totalorder %s25, 1
      %p190 = por %p188, %p189
      %p191 = scmp.ne.s32.totalorder %s182, %s183
      %p192 = scmp.eq.s32.totalorder %s25, 0
      %p193 = por %p191, %p192
      %p194 = scmp.ne.s32.totalorder %s182, %s183
      %p195 = scmp.eq.s32.totalorder %s26, 1
      %p196 = por %p194, %p195
      %p198 = scmp.ne.s32.totalorder %s183, %s197
      %p199 = scmp.eq.s32.totalorder %s26, 0
      %p200 = por %p198, %p199
      %s202 = sadd.s32 %s201, 1
      %p205 = scmp.eq.s32.totalorder %s20, 1
      %p206 = scmp.ne.s32.totalorder %s201, %s203
      %p207 = scmp.eq.s32.totalorder %s20, 0
      %p208 = por %p206, %p207
      %p209 = scmp.ne.s32.totalorder %s201, %s203
      %p210 = scmp.eq.s32.totalorder %s25, 1
      %p211 = por %p209, %p210
      %p212 = scmp.ne.s32.totalorder %s203, %s204
      %p213 = scmp.eq.s32.totalorder %s25, 0
      %p214 = por %p212, %p213
      %p215 = scmp.ne.s32.totalorder %s203, %s204
      %p216 = scmp.eq.s32.totalorder %s26, 1
      %p217 = por %p215, %p216
      %p219 = scmp.ne.s32.totalorder %s204, %s218
      %p220 = scmp.eq.s32.totalorder %s26, 0
      %p221 = por %p219, %p220
      %s222 = ssub.s32 %s20, %s27
      %p223 = scmp.eq.s32.totalorder %s222, 0
      %s225 = sadd.s32 %s224, 1
      %s226 = scalar_select %p223, %s224, %s225
      %p229 = pneg %p223
      %p230 = scmp.eq.s32.totalorder %s20, 1
      %p231 = por %p229, %p230
      %p232 = scmp.ne.s32.totalorder %s224, %s227
      %p233 = scmp.eq.s32.totalorder %s20, 0
      %p234 = por %p232, %p233
      %p235 = scmp.ne.s32.totalorder %s224, %s227
      %p236 = scmp.eq.s32.totalorder %s25, 1
      %p237 = por %p235, %p236
      %p238 = scmp.ne.s32.totalorder %s227, %s228
      %p239 = scmp.eq.s32.totalorder %s25, 0
      %p240 = por %p238, %p239
      %p241 = scmp.ne.s32.totalorder %s227, %s228
      %p242 = scmp.eq.s32.totalorder %s26, 1
      %p243 = por %p241, %p242
      %p245 = scmp.ne.s32.totalorder %s228, %s244
      %p246 = scmp.eq.s32.totalorder %s26, 0
      %p247 = por %p245, %p246
      %p248 = scmp.le.s32.totalorder 1, %s20
      %p249 = scmp.lt.s32.totalorder %s20, 3
      %p250 = pnand %p248, %p249
      %p251 = pneg %p250
      // Predicated region
      $region9: #{neural_network_forward.1} parent=5 // pred_check
        _
      $region10: #{neural_network_forward.1} parent=5 // pred_check_branch
        %253 = sbr.rel (%p250) target = $region12
      $region11: #{neural_network_forward.1} parent=5 // pred_region
        %s254 = ssub.s32 %s20, 1
        // Predicated region
        $region13: #{neural_network_forward.1} parent=11 // pred_check
          %p255 = pneg %p67
        $region14: #{neural_network_forward.1} parent=11 // pred_check_branch
          %257 = sbr.rel (%p255) target = $region16
        $region15: #{neural_network_forward.1} parent=11 // pred_region
          _
        $region16: #{neural_network_forward.1} parent=11 // pred_fallthru
          _
        // Predicated region
        $region17: #{neural_network_forward.1} parent=11 // pred_check
          %p258 = pneg %p88
        $region18: #{neural_network_forward.1} parent=11 // pred_check_branch
          %260 = sbr.rel (%p258) target = $region20
        $region19: #{neural_network_forward.1} parent=11 // pred_region
          _
        $region20: #{neural_network_forward.1} parent=11 // pred_fallthru
          _
        // Predicated region
        $region21: #{neural_network_forward.1} parent=11 // pred_check
          %p261 = pneg %p109
        $region22: #{neural_network_forward.1} parent=11 // pred_check_branch
          %263 = sbr.rel (%p261) target = $region24
        $region23: #{neural_network_forward.1} parent=11 // pred_region
          _
        $region24: #{neural_network_forward.1} parent=11 // pred_fallthru
          _
        // Predicated region
        $region25: #{neural_network_forward.1} parent=11 // pred_check
          %p264 = pneg %p130
        $region26: #{neural_network_forward.1} parent=11 // pred_check_branch
          %266 = sbr.rel (%p264) target = $region28
        $region27: #{neural_network_forward.1} parent=11 // pred_region
          _
        $region28: #{neural_network_forward.1} parent=11 // pred_fallthru
          _
        // Predicated region
        $region29: #{neural_network_forward.1} parent=11 // pred_check
          %p267 = pneg %p151
        $region30: #{neural_network_forward.1} parent=11 // pred_check_branch
          %269 = sbr.rel (%p267) target = $region32
        $region31: #{neural_network_forward.1} parent=11 // pred_region
          _
        $region32: #{neural_network_forward.1} parent=11 // pred_fallthru
          _
        // Predicated region
        $region33: #{neural_network_forward.1} parent=11 // pred_check
          %p270 = pneg %p172
        $region34: #{neural_network_forward.1} parent=11 // pred_check_branch
          %272 = sbr.rel (%p270) target = $region36
        $region35: #{neural_network_forward.1} parent=11 // pred_region
          _
        $region36: #{neural_network_forward.1} parent=11 // pred_fallthru
          _
        // Predicated region
        $region37: #{neural_network_forward.1} parent=11 // pred_check
          %p273 = pneg %p193
        $region38: #{neural_network_forward.1} parent=11 // pred_check_branch
          %275 = sbr.rel (%p273) target = $region40
        $region39: #{neural_network_forward.1} parent=11 // pred_region
          _
        $region40: #{neural_network_forward.1} parent=11 // pred_fallthru
          _
        // Predicated region
        $region41: #{neural_network_forward.1} parent=11 // pred_check
          %p276 = pneg %p214
        $region42: #{neural_network_forward.1} parent=11 // pred_check_branch
          %278 = sbr.rel (%p276) target = $region44
        $region43: #{neural_network_forward.1} parent=11 // pred_region
          _
        $region44: #{neural_network_forward.1} parent=11 // pred_fallthru
          _
      $region12: #{neural_network_forward.1} parent=5 // pred_fallthru
        _
      %p279 = scmp.lt.s32.totalorder %s20, 2
      // Predicated region
      $region45: #{neural_network_forward.1} parent=5 // pred_check
        %p280 = pneg %p279
      $region46: #{neural_network_forward.1} parent=5 // pred_check_branch
        %282 = sbr.rel (%p280) target = $region48
      $region47: #{neural_network_forward.1} parent=5 // pred_region
        // Predicated region
        $region49: #{neural_network_forward.1} parent=47 // pred_check
          %p283 = pneg %p40
        $region50: #{neural_network_forward.1} parent=47 // pred_check_branch
          %285 = sbr.rel (%p283) target = $region52
        $region51: #{neural_network_forward.1} parent=47 // pred_region
          %s286 = sand.u32 %s30, 1
          %s287 = sand.u32 %s30, 1
          %s288 = smul.addr %s287, 64
          %s289 = scalar_lea.vmem [#allocation3], %s288
          %s290 = smul.u32 4, %s20
          %s291 = smul.addr %s290, 8
          %s292 = scalar_lea.vmem %s0, %s291
          // Predicated region
          $region53: #{neural_network_forward.1} parent=51 // pred_check
            _
          $region54: #{neural_network_forward.1} parent=51 // pred_check_branch
            %294 = sbr.rel (0) target = $region56
          $region55: #{neural_network_forward.1} parent=51 // pred_region
            // Predicated region
            $region57: #{neural_network_forward.1} parent=55 // pred_check
              _
            $region58: #{neural_network_forward.1} parent=55 // pred_check_branch
              %296 = sbr.rel (0) target = $region60
            $region59: #{neural_network_forward.1} parent=55 // pred_region
              loop: start=0, step=1, limit=1
              $region61: #{neural_network_forward.1} parent=59 // loop_pre_header
                _
              $region62: #{neural_network_forward.1} parent=59 // loop_header
                %s298 = sphi 0, %s302
                %p299 = scmp.ge.s32.totalorder %s298, 1
                %s303 = sphi %s292, %s292
                %s304 = sphi %s289, %s289
              $region63: #{neural_network_forward.1} parent=59 // loop_header_branch
                %301 = sbr.rel (%p299) target = $region67
              $region64: #{neural_network_forward.1} parent=59 // loop_body
                %v305 = vld [vmem:[%s303] sm:$0xff]
                %306 = vst [vmem:[%s304] sm:$0xff] %v305
                %v307 = vld [vmem:[%s303 + $0x8] sm:$0xff]
                %308 = vst [vmem:[%s304 + $0x8] sm:$0xff] %v307
                %v309 = vld [vmem:[%s303 + $0x10] sm:$0xff]
                %310 = vst [vmem:[%s304 + $0x10] sm:$0xff] %v309
                %v311 = vld [vmem:[%s303 + $0x18] sm:$0xff]
                %312 = vst [vmem:[%s304 + $0x18] sm:$0xff] %v311
                %v313 = vld [vmem:[%s303 + $0x40] sm:$0xff]
                %314 = vst [vmem:[%s304 + $0x20] sm:$0xff] %v313
                %v315 = vld [vmem:[%s303 + $0x48] sm:$0xff]
                %316 = vst [vmem:[%s304 + $0x28] sm:$0xff] %v315
                %v317 = vld [vmem:[%s303 + $0x50] sm:$0xff]
                %318 = vst [vmem:[%s304 + $0x30] sm:$0xff] %v317
                %v319 = vld [vmem:[%s303 + $0x58] sm:$0xff]
                %320 = vst [vmem:[%s304 + $0x38] sm:$0xff] %v319
              $region65: #{neural_network_forward.1} parent=59 // loop_footer
                %s302 = sadd.s32 1, %s298
              $region66: #{neural_network_forward.1} parent=59 // loop_footer_branch
                %297 = sbr.rel target = $region62
              $region67: #{neural_network_forward.1} parent=59 // loop_exit
                _
            $region60: #{neural_network_forward.1} parent=55 // pred_fallthru
              _
            // Predicated region
            $region68: #{neural_network_forward.1} parent=55 // pred_check
              _
            $region69: #{neural_network_forward.1} parent=55 // pred_check_branch
              %322 = sbr.rel target = $region71
            $region70: #{neural_network_forward.1} parent=55 // pred_region
              _
            $region71: #{neural_network_forward.1} parent=55 // pred_fallthru
              _
          $region56: #{neural_network_forward.1} parent=51 // pred_fallthru
            _
          %323 = vnop
        $region52: #{neural_network_forward.1} parent=47 // pred_fallthru
          _
      $region48: #{neural_network_forward.1} parent=5 // pred_fallthru
        _
      %p324 = scmp.le.s32.totalorder 1, %s20
      %p325 = scmp.lt.s32.totalorder %s20, 3
      %p326 = pnand %p324, %p325
      %p327 = pneg %p326
      // Predicated region
      $region72: #{neural_network_forward.1} parent=5 // pred_check
        _
      $region73: #{neural_network_forward.1} parent=5 // pred_check_branch
        %329 = sbr.rel (%p326) target = $region75
      $region74: #{neural_network_forward.1} parent=5 // pred_region
        %s330 = ssub.s32 %s20, 1
        %s331 = sand.u32 %s33, 1
        %s332 = sand.u32 %s33, 1
        %s333 = smul.addr %s332, 64
        %s334 = scalar_lea.vmem [#allocation3], %s333
        // Predicated region
        $region76: #{neural_network_forward.1} parent=74 // pred_check
          %p335 = pneg %p46
        $region77: #{neural_network_forward.1} parent=74 // pred_check_branch
          %337 = sbr.rel (%p335) target = $region79
        $region78: #{neural_network_forward.1} parent=74 // pred_region
          _
        $region79: #{neural_network_forward.1} parent=74 // pred_fallthru
          _
        %s338 = sand.u32 %s33, 1
        %s339 = sand.u32 %s33, 1
        %s340 = smul.addr %s339, 64
        %s341 = scalar_lea.vmem [#allocation3], %s340
        %p342 = pneg %p46
        %p343 = pneg %p43
        %p344 = pneg %p67
        %p345 = pneg %p64
        %p346 = pneg %p88
        %p347 = pneg %p85
        %p348 = pneg %p109
        %p349 = pneg %p106
        %p350 = pneg %p130
        %p351 = pneg %p127
        %p352 = pneg %p151
        %p353 = pneg %p148
        %p354 = pneg %p172
        %p355 = pneg %p169
        %p356 = pneg %p193
        %p357 = pneg %p190
        %p358 = pneg %p214
        %p359 = pneg %p211
        %p360 = pneg %p240
        %p361 = pneg %p237
        %s362 = sand.u32 %s227, 1
        %s363 = scalar_lea.sflag [#allocation5], %s362
        %s364 = sand.u32 %s227, 1
        %s365 = smul.addr %s364, 4
        %s366 = scalar_lea.vmem [#allocation4], %s365
        %s367 = smul.u32 4, %s25
        %s368 = smul.u32 4, %s25
        %v369 = vld [vmem:[%s334] sm:$0xff]
        %v370 = vld [vmem:[%s334 + $0x8] sm:$0xff]
        %v371 = vld [vmem:[%s334 + $0x10] sm:$0xff]
        %v372 = vld [vmem:[%s334 + $0x18] sm:$0xff]
        %v373 = vld [vmem:[%s334 + $0x20] sm:$0xff]
        %v374 = vld [vmem:[%s334 + $0x28] sm:$0xff]
        %v375 = vld [vmem:[%s334 + $0x30] sm:$0xff]
        %v376 = vld [vmem:[%s334 + $0x38] sm:$0xff]
        %v377 = vld [vmem:[%s1] sm:$0xff]
        %v378 = vld [vmem:[%s1 + $0x8] sm:$0xff]
        %v379 = vld [vmem:[%s1 + $0x10] sm:$0xff]
        %v380 = vld [vmem:[%s1 + $0x18] sm:$0xff]
        %v381 = vld [vmem:[%s2] sm:$0xff]
        %v382 = vld [vmem:[%s2 + $0x8] sm:$0xff]
        %v383 = vld [vmem:[%s2 + $0x10] sm:$0xff]
        %v384 = vld [vmem:[%s2 + $0x18] sm:$0xff]
        %386 = vset.pattern.permute.xlu0 0
        %387 = vperm.xlu0 %386, %v381
        %v388 = vpop.permute.xlu0 %387
        %391 = vset.pattern.permute.xlu0 0
        %392 = vperm.xlu0 %391, %v382
        %v393 = vpop.permute.xlu0 %392
        %396 = vset.pattern.permute.xlu0 0
        %397 = vperm.xlu0 %396, %v383
        %v398 = vpop.permute.xlu0 %397
        %401 = vset.pattern.permute.xlu0 0
        %402 = vperm.xlu0 %401, %v384
        %v403 = vpop.permute.xlu0 %402
        %vm405 = vcmask 130048
        %v407 = vsel %vm405, %v377, 0
        %v410 = vsel %vm405, %v378, 0
        %v413 = vsel %vm405, %v379, 0
        %v416 = vsel %vm405, %v380, 0
        %418 = vmatpush.msra.mxu0 0.0
        %419 = vmatpush.msra.mxu0 0.0
        %420 = vmatpush.msra.mxu0 0.0
        %421 = vmatpush.msra.mxu0 0.0
        %422 = vmatpush.msra.mxu0 0.0
        %423 = vmatpush.msra.mxu0 0.0
        %424 = vmatpush.msra.mxu0 0.0
        %425 = vmatpush.msra.mxu0 0.0
        %426 = vmatpush.msra.mxu0 0.0
        %427 = vmatpush.msra.mxu0 0.0
        %428 = vmatpush.msra.mxu0 0.0
        %429 = vmatpush.msra.mxu0 0.0
        %430 = vmatpush.msra.mxu0 0.0
        %431 = vmatpush.msra.mxu0 0.0
        %432 = vmatpush.msra.mxu0 %v373
        %433 = vmatpush.msra.mxu0 %v369
        %434 = vmatmul.f32.gmra.mxu0 %v407
        %v435 = vpop.f32.mrf.mxu0
        %v436 = vadd.f32 %v388, %v435
        %437 = vmatmul.f32.gmra.mxu0 %v410
        %v438 = vpop.f32.mrf.mxu0
        %v439 = vadd.f32 %v393, %v438
        %440 = vmatmul.f32.gmra.mxu0 %v413
        %v441 = vpop.f32.mrf.mxu0
        %v442 = vadd.f32 %v398, %v441
        %443 = vmatmul.f32.gmra.mxu0 %v416
        %v444 = vpop.f32.mrf.mxu0
        %v445 = vadd.f32 %v403, %v444
        %446 = vdwg.mxu0
        %447 = vmatpush.msra.mxu0 0.0
        %448 = vmatpush.msra.mxu0 0.0
        %449 = vmatpush.msra.mxu0 0.0
        %450 = vmatpush.msra.mxu0 0.0
        %451 = vmatpush.msra.mxu0 0.0
        %452 = vmatpush.msra.mxu0 0.0
        %453 = vmatpush.msra.mxu0 0.0
        %454 = vmatpush.msra.mxu0 0.0
        %455 = vmatpush.msra.mxu0 0.0
        %456 = vmatpush.msra.mxu0 0.0
        %457 = vmatpush.msra.mxu0 0.0
        %458 = vmatpush.msra.mxu0 0.0
        %459 = vmatpush.msra.mxu0 0.0
        %460 = vmatpush.msra.mxu0 0.0
        %461 = vmatpush.msra.mxu0 %v374
        %462 = vmatpush.msra.mxu0 %v370
        %463 = vmatmul.f32.gmra.mxu0 %v407
        %v464 = vpop.f32.mrf.mxu0
        %v465 = vadd.f32 %v388, %v464
        %466 = vmatmul.f32.gmra.mxu0 %v410
        %v467 = vpop.f32.mrf.mxu0
        %v468 = vadd.f32 %v393, %v467
        %469 = vmatmul.f32.gmra.mxu0 %v413
        %v470 = vpop.f32.mrf.mxu0
        %v471 = vadd.f32 %v398, %v470
        %472 = vmatmul.f32.gmra.mxu0 %v416
        %v473 = vpop.f32.mrf.mxu0
        %v474 = vadd.f32 %v403, %v473
        %475 = vdwg.mxu0
        %476 = vmatpush.msra.mxu0 0.0
        %477 = vmatpush.msra.mxu0 0.0
        %478 = vmatpush.msra.mxu0 0.0
        %479 = vmatpush.msra.mxu0 0.0
        %480 = vmatpush.msra.mxu0 0.0
        %481 = vmatpush.msra.mxu0 0.0
        %482 = vmatpush.msra.mxu0 0.0
        %483 = vmatpush.msra.mxu0 0.0
        %484 = vmatpush.msra.mxu0 0.0
        %485 = vmatpush.msra.mxu0 0.0
        %486 = vmatpush.msra.mxu0 0.0
        %487 = vmatpush.msra.mxu0 0.0
        %488 = vmatpush.msra.mxu0 0.0
        %489 = vmatpush.msra.mxu0 0.0
        %490 = vmatpush.msra.mxu0 %v375
        %491 = vmatpush.msra.mxu0 %v371
        %492 = vmatmul.f32.gmra.mxu0 %v407
        %v493 = vpop.f32.mrf.mxu0
        %v494 = vadd.f32 %v388, %v493
        %495 = vmatmul.f32.gmra.mxu0 %v410
        %v496 = vpop.f32.mrf.mxu0
        %v497 = vadd.f32 %v393, %v496
        %498 = vmatmul.f32.gmra.mxu0 %v413
        %v499 = vpop.f32.mrf.mxu0
        %v500 = vadd.f32 %v398, %v499
        %501 = vmatmul.f32.gmra.mxu0 %v416
        %v502 = vpop.f32.mrf.mxu0
        %v503 = vadd.f32 %v403, %v502
        %504 = vdwg.mxu0
        %505 = vmatpush.msra.mxu0 0.0
        %506 = vmatpush.msra.mxu0 0.0
        %507 = vmatpush.msra.mxu0 0.0
        %508 = vmatpush.msra.mxu0 0.0
        %509 = vmatpush.msra.mxu0 0.0
        %510 = vmatpush.msra.mxu0 0.0
        %511 = vmatpush.msra.mxu0 0.0
        %512 = vmatpush.msra.mxu0 0.0
        %513 = vmatpush.msra.mxu0 0.0
        %514 = vmatpush.msra.mxu0 0.0
        %515 = vmatpush.msra.mxu0 0.0
        %516 = vmatpush.msra.mxu0 0.0
        %517 = vmatpush.msra.mxu0 0.0
        %518 = vmatpush.msra.mxu0 0.0
        %519 = vmatpush.msra.mxu0 %v376
        %520 = vmatpush.msra.mxu0 %v372
        %521 = vmatmul.f32.gmra.mxu0 %v407
        %v522 = vpop.f32.mrf.mxu0
        %v523 = vadd.f32 %v388, %v522
        %524 = vmatmul.f32.gmra.mxu0 %v410
        %v525 = vpop.f32.mrf.mxu0
        %v526 = vadd.f32 %v393, %v525
        %527 = vmatmul.f32.gmra.mxu0 %v413
        %v528 = vpop.f32.mrf.mxu0
        %v529 = vadd.f32 %v398, %v528
        %530 = vmatmul.f32.gmra.mxu0 %v416
        %v531 = vpop.f32.mrf.mxu0
        %v532 = vadd.f32 %v403, %v531
        %533 = vdwg.mxu0
        %v534 = vmax.f32 %v436, 0.0
        %v535 = vmax.f32 %v465, 0.0
        %v536 = vmax.f32 %v494, 0.0
        %v537 = vmax.f32 %v523, 0.0
        %v538 = vmax.f32 %v439, 0.0
        %v539 = vmax.f32 %v468, 0.0
        %v540 = vmax.f32 %v497, 0.0
        %v541 = vmax.f32 %v526, 0.0
        %v542 = vmax.f32 %v442, 0.0
        %v543 = vmax.f32 %v471, 0.0
        %v544 = vmax.f32 %v500, 0.0
        %v545 = vmax.f32 %v529, 0.0
        %v546 = vmax.f32 %v445, 0.0
        %v547 = vmax.f32 %v474, 0.0
        %v548 = vmax.f32 %v503, 0.0
        %v549 = vmax.f32 %v532, 0.0
        %v550 = vld [vmem:[%s3] sm:$0xff]
        %v551 = vld [vmem:[%s3 + $0x8] sm:$0xff]
        %v552 = vld [vmem:[%s4] sm:$0xff]
        %v553 = vld [vmem:[%s4 + $0x8] sm:$0xff]
        %555 = vset.pattern.permute.xlu0 0
        %556 = vperm.xlu0 %555, %v552
        %v557 = vpop.permute.xlu0 %556
        %560 = vset.pattern.permute.xlu0 0
        %561 = vperm.xlu0 %560, %v553
        %v562 = vpop.permute.xlu0 %561
        %vm564 = vcmask 261120
        %v566 = vsel %vm564, %v550, 0
        %v569 = vsel %vm564, %v551, 0
        %571 = vmatpush.msra.mxu0 0.0
        %572 = vmatpush.msra.mxu0 0.0
        %573 = vmatpush.msra.mxu0 0.0
        %574 = vmatpush.msra.mxu0 0.0
        %575 = vmatpush.msra.mxu0 0.0
        %576 = vmatpush.msra.mxu0 0.0
        %577 = vmatpush.msra.mxu0 0.0
        %578 = vmatpush.msra.mxu0 0.0
        %579 = vmatpush.msra.mxu0 0.0
        %580 = vmatpush.msra.mxu0 0.0
        %581 = vmatpush.msra.mxu0 0.0
        %582 = vmatpush.msra.mxu0 0.0
        %583 = vmatpush.msra.mxu0 %v546
        %584 = vmatpush.msra.mxu0 %v542
        %585 = vmatpush.msra.mxu0 %v538
        %586 = vmatpush.msra.mxu0 %v534
        %587 = vmatmul.f32.gmra.mxu0 %v566
        %v588 = vpop.f32.mrf.mxu0
        %v589 = vadd.f32 %v557, %v588
        %590 = vmatmul.f32.gmra.mxu0 %v569
        %v591 = vpop.f32.mrf.mxu0
        %v592 = vadd.f32 %v562, %v591
        %593 = vdwg.mxu0
        %594 = vmatpush.msra.mxu0 0.0
        %595 = vmatpush.msra.mxu0 0.0
        %596 = vmatpush.msra.mxu0 0.0
        %597 = vmatpush.msra.mxu0 0.0
        %598 = vmatpush.msra.mxu0 0.0
        %599 = vmatpush.msra.mxu0 0.0
        %600 = vmatpush.msra.mxu0 0.0
        %601 = vmatpush.msra.mxu0 0.0
        %602 = vmatpush.msra.mxu0 0.0
        %603 = vmatpush.msra.mxu0 0.0
        %604 = vmatpush.msra.mxu0 0.0
        %605 = vmatpush.msra.mxu0 0.0
        %606 = vmatpush.msra.mxu0 %v547
        %607 = vmatpush.msra.mxu0 %v543
        %608 = vmatpush.msra.mxu0 %v539
        %609 = vmatpush.msra.mxu0 %v535
        %610 = vmatmul.f32.gmra.mxu0 %v566
        %v611 = vpop.f32.mrf.mxu0
        %v612 = vadd.f32 %v557, %v611
        %613 = vmatmul.f32.gmra.mxu0 %v569
        %v614 = vpop.f32.mrf.mxu0
        %v615 = vadd.f32 %v562, %v614
        %616 = vdwg.mxu0
        %617 = vmatpush.msra.mxu0 0.0
        %618 = vmatpush.msra.mxu0 0.0
        %619 = vmatpush.msra.mxu0 0.0
        %620 = vmatpush.msra.mxu0 0.0
        %621 = vmatpush.msra.mxu0 0.0
        %622 = vmatpush.msra.mxu0 0.0
        %623 = vmatpush.msra.mxu0 0.0
        %624 = vmatpush.msra.mxu0 0.0
        %625 = vmatpush.msra.mxu0 0.0
        %626 = vmatpush.msra.mxu0 0.0
        %627 = vmatpush.msra.mxu0 0.0
        %628 = vmatpush.msra.mxu0 0.0
        %629 = vmatpush.msra.mxu0 %v548
        %630 = vmatpush.msra.mxu0 %v544
        %631 = vmatpush.msra.mxu0 %v540
        %632 = vmatpush.msra.mxu0 %v536
        %633 = vmatmul.f32.gmra.mxu0 %v566
        %v634 = vpop.f32.mrf.mxu0
        %v635 = vadd.f32 %v557, %v634
        %636 = vmatmul.f32.gmra.mxu0 %v569
        %v637 = vpop.f32.mrf.mxu0
        %v638 = vadd.f32 %v562, %v637
        %639 = vdwg.mxu0
        %640 = vmatpush.msra.mxu0 0.0
        %641 = vmatpush.msra.mxu0 0.0
        %642 = vmatpush.msra.mxu0 0.0
        %643 = vmatpush.msra.mxu0 0.0
        %644 = vmatpush.msra.mxu0 0.0
        %645 = vmatpush.msra.mxu0 0.0
        %646 = vmatpush.msra.mxu0 0.0
        %647 = vmatpush.msra.mxu0 0.0
        %648 = vmatpush.msra.mxu0 0.0
        %649 = vmatpush.msra.mxu0 0.0
        %650 = vmatpush.msra.mxu0 0.0
        %651 = vmatpush.msra.mxu0 0.0
        %652 = vmatpush.msra.mxu0 %v549
        %653 = vmatpush.msra.mxu0 %v545
        %654 = vmatpush.msra.mxu0 %v541
        %655 = vmatpush.msra.mxu0 %v537
        %656 = vmatmul.f32.gmra.mxu0 %v566
        %v657 = vpop.f32.mrf.mxu0
        %v658 = vadd.f32 %v557, %v657
        %659 = vmatmul.f32.gmra.mxu0 %v569
        %v660 = vpop.f32.mrf.mxu0
        %v661 = vadd.f32 %v562, %v660
        %662 = vdwg.mxu0
        %v663 = vmax.f32 %v589, 0.0
        %v664 = vmax.f32 %v612, 0.0
        %v665 = vmax.f32 %v635, 0.0
        %v666 = vmax.f32 %v658, 0.0
        %v667 = vmax.f32 %v592, 0.0
        %v668 = vmax.f32 %v615, 0.0
        %v669 = vmax.f32 %v638, 0.0
        %v670 = vmax.f32 %v661, 0.0
        %v671 = vld [vmem:[%s5] sm:$0xff]
        %v672 = vld [vmem:[%s6] sm:$0xff]
        %674 = vset.pattern.permute.xlu0 0
        %675 = vperm.xlu0 %674, %v672
        %v676 = vpop.permute.xlu0 %675
        %v679 = vsel %vm405, %v671, 0
        %681 = vmatpush.msra.mxu0 0.0
        %682 = vmatpush.msra.mxu0 0.0
        %683 = vmatpush.msra.mxu0 0.0
        %684 = vmatpush.msra.mxu0 0.0
        %685 = vmatpush.msra.mxu0 0.0
        %686 = vmatpush.msra.mxu0 0.0
        %687 = vmatpush.msra.mxu0 0.0
        %688 = vmatpush.msra.mxu0 0.0
        %689 = vmatpush.msra.mxu0 0.0
        %690 = vmatpush.msra.mxu0 0.0
        %691 = vmatpush.msra.mxu0 0.0
        %692 = vmatpush.msra.mxu0 0.0
        %693 = vmatpush.msra.mxu0 0.0
        %694 = vmatpush.msra.mxu0 0.0
        %695 = vmatpush.msra.mxu0 %v667
        %696 = vmatpush.msra.mxu0 %v663
        %697 = vmatmul.f32.gmra.mxu0 %v679
        %v698 = vpop.f32.mrf.mxu0
        %v699 = vadd.f32 %v676, %v698
        %700 = vdwg.mxu0
        %701 = vmatpush.msra.mxu0 0.0
        %702 = vmatpush.msra.mxu0 0.0
        %703 = vmatpush.msra.mxu0 0.0
        %704 = vmatpush.msra.mxu0 0.0
        %705 = vmatpush.msra.mxu0 0.0
        %706 = vmatpush.msra.mxu0 0.0
        %707 = vmatpush.msra.mxu0 0.0
        %708 = vmatpush.msra.mxu0 0.0
        %709 = vmatpush.msra.mxu0 0.0
        %710 = vmatpush.msra.mxu0 0.0
        %711 = vmatpush.msra.mxu0 0.0
        %712 = vmatpush.msra.mxu0 0.0
        %713 = vmatpush.msra.mxu0 0.0
        %714 = vmatpush.msra.mxu0 0.0
        %715 = vmatpush.msra.mxu0 %v668
        %716 = vmatpush.msra.mxu0 %v664
        %717 = vmatmul.f32.gmra.mxu0 %v679
        %v718 = vpop.f32.mrf.mxu0
        %v719 = vadd.f32 %v676, %v718
        %720 = vdwg.mxu0
        %721 = vmatpush.msra.mxu0 0.0
        %722 = vmatpush.msra.mxu0 0.0
        %723 = vmatpush.msra.mxu0 0.0
        %724 = vmatpush.msra.mxu0 0.0
        %725 = vmatpush.msra.mxu0 0.0
        %726 = vmatpush.msra.mxu0 0.0
        %727 = vmatpush.msra.mxu0 0.0
        %728 = vmatpush.msra.mxu0 0.0
        %729 = vmatpush.msra.mxu0 0.0
        %730 = vmatpush.msra.mxu0 0.0
        %731 = vmatpush.msra.mxu0 0.0
        %732 = vmatpush.msra.mxu0 0.0
        %733 = vmatpush.msra.mxu0 0.0
        %734 = vmatpush.msra.mxu0 0.0
        %735 = vmatpush.msra.mxu0 %v669
        %736 = vmatpush.msra.mxu0 %v665
        %737 = vmatmul.f32.gmra.mxu0 %v679
        %v738 = vpop.f32.mrf.mxu0
        %v739 = vadd.f32 %v676, %v738
        %740 = vdwg.mxu0
        %741 = vmatpush.msra.mxu0 0.0
        %742 = vmatpush.msra.mxu0 0.0
        %743 = vmatpush.msra.mxu0 0.0
        %744 = vmatpush.msra.mxu0 0.0
        %745 = vmatpush.msra.mxu0 0.0
        %746 = vmatpush.msra.mxu0 0.0
        %747 = vmatpush.msra.mxu0 0.0
        %748 = vmatpush.msra.mxu0 0.0
        %749 = vmatpush.msra.mxu0 0.0
        %750 = vmatpush.msra.mxu0 0.0
        %751 = vmatpush.msra.mxu0 0.0
        %752 = vmatpush.msra.mxu0 0.0
        %753 = vmatpush.msra.mxu0 0.0
        %754 = vmatpush.msra.mxu0 0.0
        %755 = vmatpush.msra.mxu0 %v670
        %756 = vmatpush.msra.mxu0 %v666
        %757 = vmatmul.f32.gmra.mxu0 %v679
        %v758 = vpop.f32.mrf.mxu0
        %v759 = vadd.f32 %v676, %v758
        %760 = vdwg.mxu0
        %v761 = vmax.f32 %v699, 0.0
        %v762 = vmax.f32 %v719, 0.0
        %v763 = vmax.f32 %v739, 0.0
        %v764 = vmax.f32 %v759, 0.0
        %v765 = vld [vmem:[%s7] sm:$0xff]
        %v766 = vld [vmem:[#allocation2] sm:$0x1]
        %768 = vset.pattern.permute.xlu0 0
        %769 = vperm.xlu0 %768, %v765
        %v770 = vpop.permute.xlu0 %769
        %v772 = vmul.f32 %v761, %v770
        %v773 = vmul.f32 %v762, %v770
        %v774 = vmul.f32 %v763, %v770
        %v775 = vmul.f32 %v764, %v770
        %v776 = vrot.slane %v772, 4
        %v777 = vadd.f32 %v772, %v776
        %v778 = vrot.slane %v777, 2
        %v779 = vadd.f32 %v777, %v778
        %v780 = vrot.slane %v779, 1
        %v781 = vadd.f32 %v779, %v780
        %v782 = vrot.slane %v773, 4
        %v783 = vadd.f32 %v773, %v782
        %v784 = vrot.slane %v783, 2
        %v785 = vadd.f32 %v783, %v784
        %v786 = vrot.slane %v785, 1
        %v787 = vadd.f32 %v785, %v786
        %v788 = vrot.slane %v774, 4
        %v789 = vadd.f32 %v774, %v788
        %v790 = vrot.slane %v789, 2
        %v791 = vadd.f32 %v789, %v790
        %v792 = vrot.slane %v791, 1
        %v793 = vadd.f32 %v791, %v792
        %v794 = vrot.slane %v775, 4
        %v795 = vadd.f32 %v775, %v794
        %v796 = vrot.slane %v795, 2
        %v797 = vadd.f32 %v795, %v796
        %v798 = vrot.slane %v797, 1
        %v799 = vadd.f32 %v797, %v798
        %801 = vset.pattern.permute.xlu0 0
        %802 = vperm.xlu0 %801, %v766
        %v803 = vpop.permute.xlu0 %802
        %v805 = vperm.slane %v803, 0
        %v806 = vadd.f32 %v781, %v805
        %v807 = vadd.f32 %v787, %v805
        %v808 = vadd.f32 %v793, %v805
        %v809 = vadd.f32 %v799, %v805
        %v814 = vrot.slane %v807, 7
        %v815 = vrot.slane %v808, 6
        %v816 = vrot.slane %v809, 5
        %vm817 = vcmask 1040384
        %v818 = vsel %vm817, %v806, %v814
        %vm819 = vcmask 1042434
        %v820 = vsel %vm819, %v815, %v816
        %vm821 = vcmask 1041408
        %v822 = vsel %vm821, %v818, %v820
        %v824 = vlaneseq
        %vm825 = vcmp.ge.s32.totalorder %v824, 0
        %vm826 = vcmp.lt.s32.totalorder %v824, 512
        %vm827 = vmand %vm825, %vm826
        %828 = vst.msk [vmem:[%s366] sm:$0xf] %vm827, %v822
        %s829 = sand.u32 %s227, 1
        %s830 = scalar_lea.sflag [#allocation5], %s829
        %s831 = sand.u32 %s227, 1
        %s832 = smul.addr %s831, 4
        %s833 = scalar_lea.vmem [#allocation4], %s832
        // Predicated region
        $region80: #{neural_network_forward.1} parent=74 // pred_check
          %p834 = pneg %p237
        $region81: #{neural_network_forward.1} parent=74 // pred_check_branch
          %836 = sbr.rel (%p834) target = $region83
        $region82: #{neural_network_forward.1} parent=74 // pred_region
          %s837 = smul.u32 4, %s25
          %839 = vsyncadd %s830, 0
          %s840 = scalar_lea.hbm %s9, %s837
          %s842 = sshll.u32 %s833, 4
          %s843 = int_to_ptr.vmem [resolvable:$true] %s842
          %s844 = sshll.u32 %s840, 4
          %s845 = int_to_ptr.hbm [resolvable:$true] %s844
          %847 = dma.vmem_to_hbm [thread:$0]  %s843, 64, %s845, %s830
        $region83: #{neural_network_forward.1} parent=74 // pred_fallthru
          _
      $region75: #{neural_network_forward.1} parent=5 // pred_fallthru
        _
      %p848 = scmp.le.s32.totalorder 2, %s20
      // Predicated region
      $region84: #{neural_network_forward.1} parent=5 // pred_check
        %p849 = pneg %p848
      $region85: #{neural_network_forward.1} parent=5 // pred_check_branch
        %851 = sbr.rel (%p849) target = $region87
      $region86: #{neural_network_forward.1} parent=5 // pred_region
        %s852 = ssub.s32 %s20, 2
        // Predicated region
        $region88: #{neural_network_forward.1} parent=86 // pred_check
          %p853 = pneg %p243
        $region89: #{neural_network_forward.1} parent=86 // pred_check_branch
          %855 = sbr.rel (%p853) target = $region91
        $region90: #{neural_network_forward.1} parent=86 // pred_region
          %s856 = sand.u32 %s228, 1
          %s857 = scalar_lea.sflag [#allocation5], %s856
          %s858 = sand.u32 %s228, 1
          %s859 = smul.addr %s858, 4
          %s860 = scalar_lea.vmem [#allocation4], %s859
          %862 = dma.done %s857, 64
        $region91: #{neural_network_forward.1} parent=86 // pred_fallthru
          _
      $region87: #{neural_network_forward.1} parent=5 // pred_fallthru
        _
    $region6: #{neural_network_forward.1} parent=1 // loop_footer
      %s24 = sadd.s32 1, %s20
    $region7: #{neural_network_forward.1} parent=1 // loop_footer_branch
      %19 = sbr.rel target = $region3
    $region8: #{neural_network_forward.1} parent=1 // loop_exit
      _
    %863 = vsyncpa [#allocation5], 1
    %s864 = scalar_lea.sflag [#allocation5], 1
    %865 = vsyncpa %s864, 1

</llo_original>
